<compile_context>
chip_gen: v5e
topology: v5e:2x2
jax: 0.10.0
libtpu: 0.0.40
codegen_flags: <defaults>
</compile_context>

<pallas_src>
import functools

import jax
import jax.numpy as jnp
from jax.experimental import pallas as pl
from jax.experimental.pallas import tpu as pltpu


def _round_up(x, m):
    return ((x + m - 1) // m) * m


# ----------------------------------------------------------------------------
# Fused kernel: grid = (row blocks, K blocks over the contraction/N axis)
#   adj_ref, mask_ref : (tm, tk)  row/col tile of adjacency and mask
#   rhs_ref           : (tk, P)   tile of the fused [support | Y | 0-pad] RHS
#   bias_ref          : (1, P)    bias padded with zeros in the Y / pad columns
#   out_ref           : (tm, P)   lane-dense fused output (resident across K)
#   acc_ref           : (tm, P)   f32 accumulator scratch
#   l1_ref            : (tm, 1)   f32 per-row L1-norm accumulator scratch
# ----------------------------------------------------------------------------
def _gcn_fused_kernel(adj_ref, mask_ref, rhs_ref, bias_ref,
                      out_ref, acc_ref, l1_ref):
    k = pl.program_id(1)

    @pl.when(k == 0)
    def _():
        acc_ref[...] = jnp.zeros_like(acc_ref)
        l1_ref[...] = jnp.zeros_like(l1_ref)

    # Un-normalized masked adjacency tile; normalization is applied to the
    # matmul result instead (diagonal row scaling commutes with the matmul).
    a = adj_ref[...] * mask_ref[...]
    l1_ref[...] += jnp.sum(jnp.abs(a), axis=1, keepdims=True)
    acc_ref[...] += jnp.dot(a, rhs_ref[...], preferred_element_type=jnp.float32)

    @pl.when(k == pl.num_programs(1) - 1)
    def _():
        inv = pl.reciprocal(jnp.maximum(l1_ref[...], 1e-12), approx=True)
        out_ref[...] = (acc_ref[...] * inv + bias_ref[...]).astype(out_ref.dtype)


# ----------------------------------------------------------------------------
# Module-equivalent wrapper
# ----------------------------------------------------------------------------
@functools.partial(jax.jit, static_argnames=("tm", "tk"))
def gcn_conv_forward(x, adj, y, weights, bias, adjacency_mask, *,
                     tm=128, tk=128):
    n = x.shape[0]
    f_out = weights.shape[1]
    c = y.shape[1]

    # support = X @ W computed by plain XLA (cheap, avoids extra launch/HBM trip)
    support = jnp.dot(x, weights, preferred_element_type=jnp.float32)

    # Fused, lane-dense RHS: [support | Y | zero pad] -> (N, P), P % 128 == 0
    p = _round_up(f_out + c, 128)
    rhs = jnp.concatenate([support, y.astype(jnp.float32)], axis=1)
    rhs = jnp.pad(rhs, ((0, 0), (0, p - (f_out + c))))
    bias_p = jnp.pad(bias.astype(jnp.float32), ((0, 0), (0, p - f_out)))

    # Pad rows to a multiple of tm and the contraction axis to a multiple of tk.
    nr = _round_up(n, tm)
    nc = _round_up(n, tk)
    adj_p = jnp.pad(adj.astype(jnp.float32), ((0, nr - n), (0, nc - n)))
    mask_p = jnp.pad(adjacency_mask.astype(jnp.float32),
                     ((0, nr - n), (0, nc - n)))
    rhs_p = jnp.pad(rhs, ((0, nc - n), (0, 0)))

    fused = pl.pallas_call(
        _gcn_fused_kernel,
        out_shape=jax.ShapeDtypeStruct((nr, p), jnp.float32),
        grid_spec=pltpu.PrefetchScalarGridSpec(
            num_scalar_prefetch=0,
            grid=(nr // tm, nc // tk),
            in_specs=[
                pl.BlockSpec((tm, tk), lambda i, k: (i, k)),   # adj tile
                pl.BlockSpec((tm, tk), lambda i, k: (i, k)),   # mask tile
                pl.BlockSpec((tk, p), lambda i, k: (k, 0)),    # fused RHS tile
                pl.BlockSpec((1, p), lambda i, k: (0, 0)),     # padded bias
            ],
            out_specs=pl.BlockSpec((tm, p), lambda i, k: (i, 0)),
            scratch_shapes=[
                pltpu.VMEM((tm, p), jnp.float32),   # accumulator
                pltpu.VMEM((tm, 1), jnp.float32),   # row L1 accumulator
            ],
        ),
        compiler_params=pltpu.CompilerParams(
            dimension_semantics=("parallel", "arbitrary"),
            vmem_limit_bytes=48 * 1024 * 1024,
        ),
    )(adj_p, mask_p, rhs_p, bias_p)

    output = fused[:n, :f_out]
    y_hat = fused[:n, f_out:f_out + c]
    return output, y_hat


def glorot_init(key, shape):
    fan_in, fan_out = shape
    limit = jnp.sqrt(6.0 / (fan_in + fan_out))
    return jax.random.uniform(key, shape, jnp.float32, -limit, limit)


if __name__ == "__main__":
    key = jax.random.PRNGKey(0)
    k_x, k_adj, k_y, k_w = jax.random.split(key, 4)

    N = 256        # number of nodes
    F_IN = 32      # input_dim
    F_OUT = 64     # output_dim
    C = 8          # number of label classes

    x = jax.random.normal(k_x, (N, F_IN), jnp.float32)
    # random sparse-ish symmetric adjacency with self loops
    adj_raw = (jax.random.uniform(k_adj, (N, N)) < 0.05).astype(jnp.float32)
    adj = jnp.maximum(adj_raw, adj_raw.T) + jnp.eye(N, dtype=jnp.float32)
    y = jax.nn.one_hot(jax.random.randint(k_y, (N,), 0, C), C, dtype=jnp.float32)

    # Parameters (deterministic init, shapes per __init__)
    weights = glorot_init(k_w, (F_IN, F_OUT))
    bias = jnp.zeros((1, F_OUT), jnp.float32)
    adjacency_mask = adj  # module stores Parameter(adj.clone()).to_dense()

    output, y_hat = gcn_conv_forward(
        x, adj, y, weights, bias, adjacency_mask, tm=128, tk=128)
    jax.block_until_ready((output, y_hat))

    # Reference check in plain JAX (matches the PyTorch forward)
    support_ref = x @ weights
    a_ref = adj * adjacency_mask
    a_ref = a_ref / jnp.maximum(
        jnp.sum(jnp.abs(a_ref), axis=1, keepdims=True), 1e-12)
    out_ref = a_ref @ support_ref + bias
    yhat_ref = a_ref @ y
    assert jnp.allclose(output, out_ref, atol=2e-3, rtol=2e-3), \
        float(jnp.max(jnp.abs(output - out_ref)))
    assert jnp.allclose(y_hat, yhat_ref, atol=2e-3, rtol=2e-3), \
        float(jnp.max(jnp.abs(y_hat - yhat_ref)))

    print("KERNEL_OK")
</pallas_src>

<mosaic_0001>
module attributes {stable_mosaic.version = 11 : i64} {
  func.func @_gcn_fused_kernel(%arg0: i32, %arg1: i32, %arg2: memref<128x128xf32, #tpu.memory_space<vmem>>, %arg3: memref<128x128xf32, #tpu.memory_space<vmem>>, %arg4: memref<128x128xf32, #tpu.memory_space<vmem>>, %arg5: memref<1x128xf32, #tpu.memory_space<vmem>>, %arg6: memref<128x128xf32, #tpu.memory_space<vmem>>, %arg7: memref<128x128xf32, #tpu.memory_space<vmem>>, %arg8: memref<128x1xf32, #tpu.memory_space<vmem>>) attributes {dimension_semantics = [#tpu.dimension_semantics<parallel>, #tpu.dimension_semantics<arbitrary>], iteration_bounds = array<i64: 2, 2>, scalar_prefetch = 0 : i64, scratch_operands = 2 : i64, tpu.core_type = #tpu.core_type<tc>, window_params = [{transform_indices = @transform_0, window_bounds = array<i64: 128, 128>}, {transform_indices = @transform_1, window_bounds = array<i64: 128, 128>}, {transform_indices = @transform_2, window_bounds = array<i64: 128, 128>}, {pipeline_mode = #tpu.pipeline_mode<synchronous>, transform_indices = @transform_3, window_bounds = array<i64: 1, 128>}, {transform_indices = @transform_4, window_bounds = array<i64: 128, 128>}]} {
    %c0_i32 = arith.constant 0 : i32
    %0 = arith.cmpi eq, %arg1, %c0_i32 : i32
    %1 = arith.extui %0 : i1 to i32
    %c0_i32_0 = arith.constant 0 : i32
    %2 = arith.cmpi ne, %1, %c0_i32_0 : i32
    scf.if %2 {
      %cst_16 = arith.constant 0.000000e+00 : f32
      %20 = vector.broadcast %cst_16 : f32 to vector<128x128xf32>
      %c0_17 = arith.constant 0 : index
      %c0_18 = arith.constant 0 : index
      %21 = vector.load %arg7[%c0_17, %c0_18] : memref<128x128xf32, #tpu.memory_space<vmem>>, vector<128x128xf32>
      tpu.vector_store %arg7[%c0_17, %c0_18], %20 {strides = array<i32>} : memref<128x128xf32, #tpu.memory_space<vmem>>, vector<128x128xf32>,
      %cst_19 = arith.constant 0.000000e+00 : f32
      %22 = vector.broadcast %cst_19 : f32 to vector<128x1xf32>
      %c0_20 = arith.constant 0 : index
      %c0_21 = arith.constant 0 : index
      %23 = vector.load %arg8[%c0_20, %c0_21] : memref<128x1xf32, #tpu.memory_space<vmem>>, vector<128x1xf32>
      tpu.vector_store %arg8[%c0_20, %c0_21], %22 {strides = array<i32>} : memref<128x1xf32, #tpu.memory_space<vmem>>, vector<128x1xf32>,
    } else {
    }
    %c0 = arith.constant 0 : index
    %c0_1 = arith.constant 0 : index
    %3 = vector.load %arg2[%c0, %c0_1] : memref<128x128xf32, #tpu.memory_space<vmem>>, vector<128x128xf32>
    %c0_2 = arith.constant 0 : index
    %c0_3 = arith.constant 0 : index
    %4 = vector.load %arg3[%c0_2, %c0_3] : memref<128x128xf32, #tpu.memory_space<vmem>>, vector<128x128xf32>
    %5 = arith.mulf %3, %4 : vector<128x128xf32>
    %c0_4 = arith.constant 0 : index
    %c0_5 = arith.constant 0 : index
    %6 = vector.load %arg8[%c0_4, %c0_5] : memref<128x1xf32, #tpu.memory_space<vmem>>, vector<128x1xf32>
    %7 = math.absf %5 : vector<128x128xf32>
    %cst = arith.constant dense<0.000000e+00> : vector<128xf32>
    %8 = vector.multi_reduction <add>, %7, %cst [1] : vector<128x128xf32> to vector<128xf32>
    %9 = vector.shape_cast %8 : vector<128xf32> to vector<128x1xf32>
    %10 = arith.addf %6, %9 : vector<128x1xf32>
    %c0_6 = arith.constant 0 : index
    %c0_7 = arith.constant 0 : index
    %11 = vector.load %arg8[%c0_6, %c0_7] : memref<128x1xf32, #tpu.memory_space<vmem>>, vector<128x1xf32>
    tpu.vector_store %arg8[%c0_6, %c0_7], %10 {strides = array<i32>} : memref<128x1xf32, #tpu.memory_space<vmem>>, vector<128x1xf32>,
    %c0_8 = arith.constant 0 : index
    %c0_9 = arith.constant 0 : index
    %12 = vector.load %arg7[%c0_8, %c0_9] : memref<128x128xf32, #tpu.memory_space<vmem>>, vector<128x128xf32>
    %c0_10 = arith.constant 0 : index
    %c0_11 = arith.constant 0 : index
    %13 = vector.load %arg4[%c0_10, %c0_11] : memref<128x128xf32, #tpu.memory_space<vmem>>, vector<128x128xf32>
    %cst_12 = arith.constant dense<0.000000e+00> : vector<128x128xf32>
    %14 = tpu.matmul %5, %13, %cst_12 {dimension_numbers = #tpu.dot_dimension_numbers<[1], [0], [0], [1], [0, 0, 1, 1], [], []>} : vector<128x128xf32>, vector<128x128xf32>, vector<128x128xf32> -> vector<128x128xf32>
    %15 = arith.addf %12, %14 : vector<128x128xf32>
    %c0_13 = arith.constant 0 : index
    %c0_14 = arith.constant 0 : index
    %16 = vector.load %arg7[%c0_13, %c0_14] : memref<128x128xf32, #tpu.memory_space<vmem>>, vector<128x128xf32>
    tpu.vector_store %arg7[%c0_13, %c0_14], %15 {strides = array<i32>} : memref<128x128xf32, #tpu.memory_space<vmem>>, vector<128x128xf32>,
    %c1_i32 = arith.constant 1 : i32
    %17 = arith.cmpi eq, %arg1, %c1_i32 : i32
    %18 = arith.extui %17 : i1 to i32
    %c0_i32_15 = arith.constant 0 : i32
    %19 = arith.cmpi ne, %18, %c0_i32_15 : i32
    scf.if %19 {
      %c0_16 = arith.constant 0 : index
      %c0_17 = arith.constant 0 : index
      %20 = vector.load %arg8[%c0_16, %c0_17] : memref<128x1xf32, #tpu.memory_space<vmem>>, vector<128x1xf32>
      %cst_18 = arith.constant 9.99999996E-13 : f32
      %21 = vector.broadcast %cst_18 : f32 to vector<128x1xf32>
      %22 = arith.maximumf %20, %21 : vector<128x1xf32>
      %23 = tpu.reciprocal %22 {approx = true} : vector<128x1xf32> -> vector<128x1xf32>
      %c0_19 = arith.constant 0 : index
      %c0_20 = arith.constant 0 : index
      %24 = vector.load %arg7[%c0_19, %c0_20] : memref<128x128xf32, #tpu.memory_space<vmem>>, vector<128x128xf32>
      %25 = vector.broadcast %23 : vector<128x1xf32> to vector<128x128xf32>
      %26 = arith.mulf %24, %25 : vector<128x128xf32>
      %c0_21 = arith.constant 0 : index
      %c0_22 = arith.constant 0 : index
      %27 = vector.load %arg5[%c0_21, %c0_22] : memref<1x128xf32, #tpu.memory_space<vmem>>, vector<1x128xf32>
      %28 = vector.broadcast %27 : vector<1x128xf32> to vector<128x128xf32>
      %29 = arith.addf %26, %28 : vector<128x128xf32>
      %c0_23 = arith.constant 0 : index
      %c0_24 = arith.constant 0 : index
      %30 = vector.load %arg6[%c0_23, %c0_24] : memref<128x128xf32, #tpu.memory_space<vmem>>, vector<128x128xf32>
      tpu.vector_store %arg6[%c0_23, %c0_24], %29 {strides = array<i32>} : memref<128x128xf32, #tpu.memory_space<vmem>>, vector<128x128xf32>,
    } else {
    }
    return
  }
  func.func @transform_0(%arg0: i32, %arg1: i32) -> (i32, i32) {
    %c0_i32 = arith.constant 0 : i32
    return %arg0, %arg1 : i32, i32
  }
  func.func @transform_1(%arg0: i32, %arg1: i32) -> (i32, i32) {
    %c0_i32 = arith.constant 0 : i32
    return %arg0, %arg1 : i32, i32
  }
  func.func @transform_2(%arg0: i32, %arg1: i32) -> (i32, i32) {
    %c0_i32 = arith.constant 0 : i32
    %c0_i32_0 = arith.constant 0 : i32
    return %arg1, %c0_i32 : i32, i32
  }
  func.func @transform_3(%arg0: i32, %arg1: i32) -> (i32, i32) {
    %c0_i32 = arith.constant 0 : i32
    %c0_i32_0 = arith.constant 0 : i32
    %c0_i32_1 = arith.constant 0 : i32
    return %c0_i32, %c0_i32_0 : i32, i32
  }
  func.func @transform_4(%arg0: i32, %arg1: i32) -> (i32, i32) {
    %c0_i32 = arith.constant 0 : i32
    %c0_i32_0 = arith.constant 0 : i32
    return %arg0, %c0_i32 : i32, i32
  }
}

</mosaic_0001>

<llo_original>
// kernel: gcn_conv_forward.1
$region0: #{gcn_conv_forward.1}
  #allocation0 [shape = 'u32[]', space=smem, size = 0x4, offset = 0x4, fixed_abs, tag = 'smem constant byte address 0x4 - core index']
  #allocation1 [shape = 'u32[72,128]{1,0:T(1,128)}', space=vmem, size = 0x9000, scoped, tag = 'internal scratch']
  #allocation2 [shape = 'f32[128,128]{1,0:T(8,128)}', space=vmem, size = 0x10000, scoped, tag = 'scratch operand']
  #allocation3 [shape = 'f32[128,1]{1,0:T(8,128)}', space=vmem, size = 0x10000, scoped, tag = 'scratch operand']
  %s0 = inlined_call_operand.vmem [shape: f32[256,256], index: 0, kind: input, shape index: {}]
  %s1 = inlined_call_operand.vmem [shape: f32[256,256], index: 1, kind: input, shape index: {}]
  %s2 = inlined_call_operand.vmem [shape: f32[256,128], index: 2, kind: input, shape index: {}]
  %s3 = inlined_call_operand.vmem [shape: f32[1,128], index: 3, kind: input, shape index: {}]
  %s4 = inlined_call_operand.vmem [shape: f32[256,128], index: 4, kind: output, shape index: {}]
  %s5 = sld [smem:[#allocation0]]
  $region133: #{gcn_conv_forward.1} parent=0
    _
  %s7 = ssub.s32 1, %s5
  %s8 = scalar_select 0, %s7, %s5
  $region1: #{gcn_conv_forward.1} parent=0
    #allocation4 [shape = 'u8[131072]{0}', space=vmem, size = 0x20000, scoped, tag = 'input window, operand 0']
    #allocation5 [shape = 'u8[131072]{0}', space=vmem, size = 0x20000, scoped, tag = 'input window, operand 1']
    loop: start=0, step=1, limit=6
    $region2: #{gcn_conv_forward.1} parent=1 // loop_pre_header
      _
    $region3: #{gcn_conv_forward.1} parent=1 // loop_header
      %s10 = sphi 0, %s14
      %p11 = scmp.ge.s32.totalorder %s10, 6
      %s17 = sphi 0, %s29
      %s18 = sphi 0, %s25
      %s19 = sphi 0, %s17
      %s20 = sphi 0, %s18
      %s21 = sphi 0, %s19
      %s22 = sphi 0, %s20
      %s34 = sphi 0, %s36
      %s37 = sphi 0, %s34
      %s38 = sphi 0, %s37
      %s54 = sphi 0, %s38
      %s62 = sphi 0, %s64
      %s65 = sphi 0, %s62
      %s66 = sphi 0, %s65
      %s82 = sphi 0, %s66
      %s88 = sphi 0, %s90
      %s91 = sphi 0, %s88
      %s92 = sphi 0, %s91
      %s108 = sphi 0, %s92
      %s112 = sphi 0, %s112
      %s114 = sphi 0, %s112
      %s115 = sphi 0, %s114
      %s129 = sphi 0, %s115
      %s135 = sphi 0, %s137
      %s138 = sphi 0, %s135
      %s139 = sphi 0, %s138
      %s155 = sphi 0, %s139
    $region4: #{gcn_conv_forward.1} parent=1 // loop_header_branch
      %13 = sbr.rel (%p11) target = $region8
    $region5: #{gcn_conv_forward.1} parent=1 // loop_body
      %s15 = ssub.s32 %s10, 1
      %s16 = ssub.s32 %s10, 2
      %s23 = sadd.s32 1, %s18
      %p24 = scmp.ge.s32.totalorder %s23, 2
      %s25 = scalar_select %p24, 0, %s23
      %s26 = sadd.s32 1, %s17
      %s27 = scalar_select %p24, %s26, %s17
      %p28 = scmp.ge.s32.totalorder %s27, 2
      %s29 = scalar_select %p28, 0, %s27
      %s30 = ssub.s32 %s17, %s29
      %s31 = ssub.s32 %s18, %s25
      %s32 = sor.u32 %s30, %s31
      %p33 = scmp.eq.s32.totalorder %s32, 0
      %s35 = sadd.s32 %s34, 1
      %s36 = scalar_select %p33, %s34, %s35
      %p39 = pneg %p33
      %p40 = scmp.eq.s32.totalorder %s10, 3
      %p41 = por %p39, %p40
      %p42 = scmp.ne.s32.totalorder %s34, %s37
      %p43 = scmp.eq.s32.totalorder %s10, 0
      %p44 = por %p42, %p43
      %p45 = scmp.ne.s32.totalorder %s34, %s37
      %p46 = scmp.eq.s32.totalorder %s15, 3
      %p47 = por %p45, %p46
      %p48 = scmp.ne.s32.totalorder %s37, %s38
      %p49 = scmp.eq.s32.totalorder %s15, 0
      %p50 = por %p48, %p49
      %p51 = scmp.ne.s32.totalorder %s37, %s38
      %p52 = scmp.eq.s32.totalorder %s16, 3
      %p53 = por %p51, %p52
      %p55 = scmp.ne.s32.totalorder %s38, %s54
      %p56 = scmp.eq.s32.totalorder %s16, 0
      %p57 = por %p55, %p56
      %s58 = ssub.s32 %s17, %s29
      %s59 = ssub.s32 %s18, %s25
      %s60 = sor.u32 %s58, %s59
      %p61 = scmp.eq.s32.totalorder %s60, 0
      %s63 = sadd.s32 %s62, 1
      %s64 = scalar_select %p61, %s62, %s63
      %p67 = pneg %p61
      %p68 = scmp.eq.s32.totalorder %s10, 3
      %p69 = por %p67, %p68
      %p70 = scmp.ne.s32.totalorder %s62, %s65
      %p71 = scmp.eq.s32.totalorder %s10, 0
      %p72 = por %p70, %p71
      %p73 = scmp.ne.s32.totalorder %s62, %s65
      %p74 = scmp.eq.s32.totalorder %s15, 3
      %p75 = por %p73, %p74
      %p76 = scmp.ne.s32.totalorder %s65, %s66
      %p77 = scmp.eq.s32.totalorder %s15, 0
      %p78 = por %p76, %p77
      %p79 = scmp.ne.s32.totalorder %s65, %s66
      %p80 = scmp.eq.s32.totalorder %s16, 3
      %p81 = por %p79, %p80
      %p83 = scmp.ne.s32.totalorder %s66, %s82
      %p84 = scmp.eq.s32.totalorder %s16, 0
      %p85 = por %p83, %p84
      %s86 = ssub.s32 %s18, %s25
      %p87 = scmp.eq.s32.totalorder %s86, 0
      %s89 = sadd.s32 %s88, 1
      %s90 = scalar_select %p87, %s88, %s89
      %p93 = pneg %p87
      %p94 = scmp.eq.s32.totalorder %s10, 3
      %p95 = por %p93, %p94
      %p96 = scmp.ne.s32.totalorder %s88, %s91
      %p97 = scmp.eq.s32.totalorder %s10, 0
      %p98 = por %p96, %p97
      %p99 = scmp.ne.s32.totalorder %s88, %s91
      %p100 = scmp.eq.s32.totalorder %s15, 3
      %p101 = por %p99, %p100
      %p102 = scmp.ne.s32.totalorder %s91, %s92
      %p103 = scmp.eq.s32.totalorder %s15, 0
      %p104 = por %p102, %p103
      %p105 = scmp.ne.s32.totalorder %s91, %s92
      %p106 = scmp.eq.s32.totalorder %s16, 3
      %p107 = por %p105, %p106
      %p109 = scmp.ne.s32.totalorder %s92, %s108
      %p110 = scmp.eq.s32.totalorder %s16, 0
      %p111 = por %p109, %p110
      %s113 = sadd.s32 %s112, 1
      %p116 = scmp.eq.s32.totalorder %s10, 3
      %p117 = scmp.ne.s32.totalorder %s112, %s114
      %p118 = scmp.eq.s32.totalorder %s10, 0
      %p119 = por %p117, %p118
      %p120 = scmp.ne.s32.totalorder %s112, %s114
      %p121 = scmp.eq.s32.totalorder %s15, 3
      %p122 = por %p120, %p121
      %p123 = scmp.ne.s32.totalorder %s114, %s115
      %p124 = scmp.eq.s32.totalorder %s15, 0
      %p125 = por %p123, %p124
      %p126 = scmp.ne.s32.totalorder %s114, %s115
      %p127 = scmp.eq.s32.totalorder %s16, 3
      %p128 = por %p126, %p127
      %p130 = scmp.ne.s32.totalorder %s115, %s129
      %p131 = scmp.eq.s32.totalorder %s16, 0
      %p132 = por %p130, %p131
      %s133 = ssub.s32 %s17, %s29
      %p134 = scmp.eq.s32.totalorder %s133, 0
      %s136 = sadd.s32 %s135, 1
      %s137 = scalar_select %p134, %s135, %s136
      %p140 = pneg %p134
      %p141 = scmp.eq.s32.totalorder %s10, 3
      %p142 = por %p140, %p141
      %p143 = scmp.ne.s32.totalorder %s135, %s138
      %p144 = scmp.eq.s32.totalorder %s10, 0
      %p145 = por %p143, %p144
      %p146 = scmp.ne.s32.totalorder %s135, %s138
      %p147 = scmp.eq.s32.totalorder %s15, 3
      %p148 = por %p146, %p147
      %p149 = scmp.ne.s32.totalorder %s138, %s139
      %p150 = scmp.eq.s32.totalorder %s15, 0
      %p151 = por %p149, %p150
      %p152 = scmp.ne.s32.totalorder %s138, %s139
      %p153 = scmp.eq.s32.totalorder %s16, 3
      %p154 = por %p152, %p153
      %p156 = scmp.ne.s32.totalorder %s139, %s155
      %p157 = scmp.eq.s32.totalorder %s16, 0
      %p158 = por %p156, %p157
      %p159 = scmp.le.s32.totalorder 1, %s10
      %p160 = scmp.lt.s32.totalorder %s10, 5
      %p161 = pnand %p159, %p160
      %p162 = pneg %p161
      // Predicated region
      $region9: #{gcn_conv_forward.1} parent=5 // pred_check
        _
      $region10: #{gcn_conv_forward.1} parent=5 // pred_check_branch
        %164 = sbr.rel (%p161) target = $region12
      $region11: #{gcn_conv_forward.1} parent=5 // pred_region
        %s165 = ssub.s32 %s10, 1
        // Predicated region
        $region13: #{gcn_conv_forward.1} parent=11 // pred_check
          %p166 = pneg %p125
        $region14: #{gcn_conv_forward.1} parent=11 // pred_check_branch
          %168 = sbr.rel (%p166) target = $region16
        $region15: #{gcn_conv_forward.1} parent=11 // pred_region
          _
        $region16: #{gcn_conv_forward.1} parent=11 // pred_fallthru
          _
      $region12: #{gcn_conv_forward.1} parent=5 // pred_fallthru
        _
      %p169 = scmp.lt.s32.totalorder %s10, 4
      // Predicated region
      $region17: #{gcn_conv_forward.1} parent=5 // pred_check
        %p170 = pneg %p169
      $region18: #{gcn_conv_forward.1} parent=5 // pred_check_branch
        %172 = sbr.rel (%p170) target = $region20
      $region19: #{gcn_conv_forward.1} parent=5 // pred_region
        // Predicated region
        $region21: #{gcn_conv_forward.1} parent=19 // pred_check
          %p173 = pneg %p44
        $region22: #{gcn_conv_forward.1} parent=19 // pred_check_branch
          %175 = sbr.rel (%p173) target = $region24
        $region23: #{gcn_conv_forward.1} parent=19 // pred_region
          %s176 = sand.u32 %s34, 1
          %s177 = sand.u32 %s34, 1
          %s178 = smul.addr %s177, 128
          %s179 = scalar_lea.vmem [#allocation4], %s178
          %s180 = smul.u32 16, %s17
          %s181 = smul.addr %s180, 2
          %s182 = sadd.s32 %s18, %s181
          %s183 = smul.addr %s182, 8
          %s184 = scalar_lea.vmem %s0, %s183
          // Predicated region
          $region25: #{gcn_conv_forward.1} parent=23 // pred_check
            _
          $region26: #{gcn_conv_forward.1} parent=23 // pred_check_branch
            %186 = sbr.rel (0) target = $region28
          $region27: #{gcn_conv_forward.1} parent=23 // pred_region
            // Predicated region
            $region29: #{gcn_conv_forward.1} parent=27 // pred_check
              _
            $region30: #{gcn_conv_forward.1} parent=27 // pred_check_branch
              %188 = sbr.rel (0) target = $region32
            $region31: #{gcn_conv_forward.1} parent=27 // pred_region
              // Predicated region
              $region44: #{gcn_conv_forward.1} parent=31 // pred_check
                _
              $region45: #{gcn_conv_forward.1} parent=31 // pred_check_branch
                %234 = sbr.rel (0) target = $region47
              $region46: #{gcn_conv_forward.1} parent=31 // pred_region
                loop: start=0, step=1, limit=1
                $region48: #{gcn_conv_forward.1} parent=46 // loop_pre_header
                  _
                $region49: #{gcn_conv_forward.1} parent=46 // loop_header
                  %s236 = sphi 0, %s240
                  %p237 = scmp.ge.s32.totalorder %s236, 1
                  %s241 = sphi %s184, %s184
                  %s242 = sphi %s179, %s179
                $region50: #{gcn_conv_forward.1} parent=46 // loop_header_branch
                  %239 = sbr.rel (%p237) target = $region54
                $region51: #{gcn_conv_forward.1} parent=46 // loop_body
                  %v243 = vld [vmem:[%s241] sm:$0xff]
                  %244 = vst [vmem:[%s242] sm:$0xff] %v243
                  %v245 = vld [vmem:[%s241 + $0x10] sm:$0xff]
                  %246 = vst [vmem:[%s242 + $0x8] sm:$0xff] %v245
                  %v247 = vld [vmem:[%s241 + $0x20] sm:$0xff]
                  %248 = vst [vmem:[%s242 + $0x10] sm:$0xff] %v247
                  %v249 = vld [vmem:[%s241 + $0x30] sm:$0xff]
                  %250 = vst [vmem:[%s242 + $0x18] sm:$0xff] %v249
                  %v251 = vld [vmem:[%s241 + $0x40] sm:$0xff]
                  %252 = vst [vmem:[%s242 + $0x20] sm:$0xff] %v251
                  %v253 = vld [vmem:[%s241 + $0x50] sm:$0xff]
                  %254 = vst [vmem:[%s242 + $0x28] sm:$0xff] %v253
                  %v255 = vld [vmem:[%s241 + $0x60] sm:$0xff]
                  %256 = vst [vmem:[%s242 + $0x30] sm:$0xff] %v255
                  %v257 = vld [vmem:[%s241 + $0x70] sm:$0xff]
                  %258 = vst [vmem:[%s242 + $0x38] sm:$0xff] %v257
                  %v259 = vld [vmem:[%s241 + $0x80] sm:$0xff]
                  %260 = vst [vmem:[%s242 + $0x40] sm:$0xff] %v259
                  %v261 = vld [vmem:[%s241 + $0x90] sm:$0xff]
                  %262 = vst [vmem:[%s242 + $0x48] sm:$0xff] %v261
                  %v263 = vld [vmem:[%s241 + $0xa0] sm:$0xff]
                  %264 = vst [vmem:[%s242 + $0x50] sm:$0xff] %v263
                  %v265 = vld [vmem:[%s241 + $0xb0] sm:$0xff]
                  %266 = vst [vmem:[%s242 + $0x58] sm:$0xff] %v265
                  %v267 = vld [vmem:[%s241 + $0xc0] sm:$0xff]
                  %268 = vst [vmem:[%s242 + $0x60] sm:$0xff] %v267
                  %v269 = vld [vmem:[%s241 + $0xd0] sm:$0xff]
                  %270 = vst [vmem:[%s242 + $0x68] sm:$0xff] %v269
                  %v271 = vld [vmem:[%s241 + $0xe0] sm:$0xff]
                  %272 = vst [vmem:[%s242 + $0x70] sm:$0xff] %v271
                  %v273 = vld [vmem:[%s241 + $0xf0] sm:$0xff]
                  %274 = vst [vmem:[%s242 + $0x78] sm:$0xff] %v273
                $region52: #{gcn_conv_forward.1} parent=46 // loop_footer
                  %s240 = sadd.s32 1, %s236
                $region53: #{gcn_conv_forward.1} parent=46 // loop_footer_branch
                  %235 = sbr.rel target = $region49
                $region54: #{gcn_conv_forward.1} parent=46 // loop_exit
                  _
              $region47: #{gcn_conv_forward.1} parent=31 // pred_fallthru
                _
              // Predicated region
              $region55: #{gcn_conv_forward.1} parent=31 // pred_check
                _
              $region56: #{gcn_conv_forward.1} parent=31 // pred_check_branch
                %276 = sbr.rel target = $region58
              $region57: #{gcn_conv_forward.1} parent=31 // pred_region
                _
              $region58: #{gcn_conv_forward.1} parent=31 // pred_fallthru
                _
            $region32: #{gcn_conv_forward.1} parent=27 // pred_fallthru
              _
            // Predicated region
            $region33: #{gcn_conv_forward.1} parent=27 // pred_check
              _
            $region34: #{gcn_conv_forward.1} parent=27 // pred_check_branch
              %190 = sbr.rel target = $region36
            $region35: #{gcn_conv_forward.1} parent=27 // pred_region
              %s192 = ssub.s32 256, 1
              loop: start=0, step=1, limit=1
              $region37: #{gcn_conv_forward.1} parent=35 // loop_pre_header
                _
              $region38: #{gcn_conv_forward.1} parent=35 // loop_header
                %s194 = sphi 0, %s198
                %p195 = scmp.ge.s32.totalorder %s194, 1
                %s199 = sphi %s184, %s184
                %s200 = sphi %s179, %s179
              $region39: #{gcn_conv_forward.1} parent=35 // loop_header_branch
                %197 = sbr.rel (%p195) target = $region43
              $region40: #{gcn_conv_forward.1} parent=35 // loop_body
                %v201 = vld [vmem:[%s199] sm:%s192]
                %202 = vst [vmem:[%s200] sm:%s192] %v201
                %v203 = vld [vmem:[%s199 + $0x10] sm:%s192]
                %204 = vst [vmem:[%s200 + $0x8] sm:%s192] %v203
                %v205 = vld [vmem:[%s199 + $0x20] sm:%s192]
                %206 = vst [vmem:[%s200 + $0x10] sm:%s192] %v205
                %v207 = vld [vmem:[%s199 + $0x30] sm:%s192]
                %208 = vst [vmem:[%s200 + $0x18] sm:%s192] %v207
                %v209 = vld [vmem:[%s199 + $0x40] sm:%s192]
                %210 = vst [vmem:[%s200 + $0x20] sm:%s192] %v209
                %v211 = vld [vmem:[%s199 + $0x50] sm:%s192]
                %212 = vst [vmem:[%s200 + $0x28] sm:%s192] %v211
                %v213 = vld [vmem:[%s199 + $0x60] sm:%s192]
                %214 = vst [vmem:[%s200 + $0x30] sm:%s192] %v213
                %v215 = vld [vmem:[%s199 + $0x70] sm:%s192]
                %216 = vst [vmem:[%s200 + $0x38] sm:%s192] %v215
                %v217 = vld [vmem:[%s199 + $0x80] sm:%s192]
                %218 = vst [vmem:[%s200 + $0x40] sm:%s192] %v217
                %v219 = vld [vmem:[%s199 + $0x90] sm:%s192]
                %220 = vst [vmem:[%s200 + $0x48] sm:%s192] %v219
                %v221 = vld [vmem:[%s199 + $0xa0] sm:%s192]
                %222 = vst [vmem:[%s200 + $0x50] sm:%s192] %v221
                %v223 = vld [vmem:[%s199 + $0xb0] sm:%s192]
                %224 = vst [vmem:[%s200 + $0x58] sm:%s192] %v223
                %v225 = vld [vmem:[%s199 + $0xc0] sm:%s192]
                %226 = vst [vmem:[%s200 + $0x60] sm:%s192] %v225
                %v227 = vld [vmem:[%s199 + $0xd0] sm:%s192]
                %228 = vst [vmem:[%s200 + $0x68] sm:%s192] %v227
                %v229 = vld [vmem:[%s199 + $0xe0] sm:%s192]
                %230 = vst [vmem:[%s200 + $0x70] sm:%s192] %v229
                %v231 = vld [vmem:[%s199 + $0xf0] sm:%s192]
                %232 = vst [vmem:[%s200 + $0x78] sm:%s192] %v231
              $region41: #{gcn_conv_forward.1} parent=35 // loop_footer
                %s198 = sadd.s32 1, %s194
              $region42: #{gcn_conv_forward.1} parent=35 // loop_footer_branch
                %193 = sbr.rel target = $region38
              $region43: #{gcn_conv_forward.1} parent=35 // loop_exit
                _
            $region36: #{gcn_conv_forward.1} parent=27 // pred_fallthru
              _
          $region28: #{gcn_conv_forward.1} parent=23 // pred_fallthru
            _
          %277 = vnop
        $region24: #{gcn_conv_forward.1} parent=19 // pred_fallthru
          _
        // Predicated region
        $region59: #{gcn_conv_forward.1} parent=19 // pred_check
          %p278 = pneg %p72
        $region60: #{gcn_conv_forward.1} parent=19 // pred_check_branch
          %280 = sbr.rel (%p278) target = $region62
        $region61: #{gcn_conv_forward.1} parent=19 // pred_region
          %s281 = sand.u32 %s62, 1
          %s282 = sand.u32 %s62, 1
          %s283 = smul.addr %s282, 128
          %s284 = scalar_lea.vmem [#allocation5], %s283
          %s285 = smul.u32 16, %s17
          %s286 = smul.addr %s285, 2
          %s287 = sadd.s32 %s18, %s286
          %s288 = smul.addr %s287, 8
          %s289 = scalar_lea.vmem %s1, %s288
          // Predicated region
          $region63: #{gcn_conv_forward.1} parent=61 // pred_check
            _
          $region64: #{gcn_conv_forward.1} parent=61 // pred_check_branch
            %291 = sbr.rel (0) target = $region66
          $region65: #{gcn_conv_forward.1} parent=61 // pred_region
            // Predicated region
            $region67: #{gcn_conv_forward.1} parent=65 // pred_check
              _
            $region68: #{gcn_conv_forward.1} parent=65 // pred_check_branch
              %293 = sbr.rel (0) target = $region70
            $region69: #{gcn_conv_forward.1} parent=65 // pred_region
              // Predicated region
              $region82: #{gcn_conv_forward.1} parent=69 // pred_check
                _
              $region83: #{gcn_conv_forward.1} parent=69 // pred_check_branch
                %339 = sbr.rel (0) target = $region85
              $region84: #{gcn_conv_forward.1} parent=69 // pred_region
                loop: start=0, step=1, limit=1
                $region86: #{gcn_conv_forward.1} parent=84 // loop_pre_header
                  _
                $region87: #{gcn_conv_forward.1} parent=84 // loop_header
                  %s341 = sphi 0, %s345
                  %p342 = scmp.ge.s32.totalorder %s341, 1
                  %s346 = sphi %s289, %s289
                  %s347 = sphi %s284, %s284
                $region88: #{gcn_conv_forward.1} parent=84 // loop_header_branch
                  %344 = sbr.rel (%p342) target = $region92
                $region89: #{gcn_conv_forward.1} parent=84 // loop_body
                  %v348 = vld [vmem:[%s346] sm:$0xff]
                  %349 = vst [vmem:[%s347] sm:$0xff] %v348
                  %v350 = vld [vmem:[%s346 + $0x10] sm:$0xff]
                  %351 = vst [vmem:[%s347 + $0x8] sm:$0xff] %v350
                  %v352 = vld [vmem:[%s346 + $0x20] sm:$0xff]
                  %353 = vst [vmem:[%s347 + $0x10] sm:$0xff] %v352
                  %v354 = vld [vmem:[%s346 + $0x30] sm:$0xff]
                  %355 = vst [vmem:[%s347 + $0x18] sm:$0xff] %v354
                  %v356 = vld [vmem:[%s346 + $0x40] sm:$0xff]
                  %357 = vst [vmem:[%s347 + $0x20] sm:$0xff] %v356
                  %v358 = vld [vmem:[%s346 + $0x50] sm:$0xff]
                  %359 = vst [vmem:[%s347 + $0x28] sm:$0xff] %v358
                  %v360 = vld [vmem:[%s346 + $0x60] sm:$0xff]
                  %361 = vst [vmem:[%s347 + $0x30] sm:$0xff] %v360
                  %v362 = vld [vmem:[%s346 + $0x70] sm:$0xff]
                  %363 = vst [vmem:[%s347 + $0x38] sm:$0xff] %v362
                  %v364 = vld [vmem:[%s346 + $0x80] sm:$0xff]
                  %365 = vst [vmem:[%s347 + $0x40] sm:$0xff] %v364
                  %v366 = vld [vmem:[%s346 + $0x90] sm:$0xff]
                  %367 = vst [vmem:[%s347 + $0x48] sm:$0xff] %v366
                  %v368 = vld [vmem:[%s346 + $0xa0] sm:$0xff]
                  %369 = vst [vmem:[%s347 + $0x50] sm:$0xff] %v368
                  %v370 = vld [vmem:[%s346 + $0xb0] sm:$0xff]
                  %371 = vst [vmem:[%s347 + $0x58] sm:$0xff] %v370
                  %v372 = vld [vmem:[%s346 + $0xc0] sm:$0xff]
                  %373 = vst [vmem:[%s347 + $0x60] sm:$0xff] %v372
                  %v374 = vld [vmem:[%s346 + $0xd0] sm:$0xff]
                  %375 = vst [vmem:[%s347 + $0x68] sm:$0xff] %v374
                  %v376 = vld [vmem:[%s346 + $0xe0] sm:$0xff]
                  %377 = vst [vmem:[%s347 + $0x70] sm:$0xff] %v376
                  %v378 = vld [vmem:[%s346 + $0xf0] sm:$0xff]
                  %379 = vst [vmem:[%s347 + $0x78] sm:$0xff] %v378
                $region90: #{gcn_conv_forward.1} parent=84 // loop_footer
                  %s345 = sadd.s32 1, %s341
                $region91: #{gcn_conv_forward.1} parent=84 // loop_footer_branch
                  %340 = sbr.rel target = $region87
                $region92: #{gcn_conv_forward.1} parent=84 // loop_exit
                  _
              $region85: #{gcn_conv_forward.1} parent=69 // pred_fallthru
                _
              // Predicated region
              $region93: #{gcn_conv_forward.1} parent=69 // pred_check
                _
              $region94: #{gcn_conv_forward.1} parent=69 // pred_check_branch
                %381 = sbr.rel target = $region96
              $region95: #{gcn_conv_forward.1} parent=69 // pred_region
                _
              $region96: #{gcn_conv_forward.1} parent=69 // pred_fallthru
                _
            $region70: #{gcn_conv_forward.1} parent=65 // pred_fallthru
              _
            // Predicated region
            $region71: #{gcn_conv_forward.1} parent=65 // pred_check
              _
            $region72: #{gcn_conv_forward.1} parent=65 // pred_check_branch
              %295 = sbr.rel target = $region74
            $region73: #{gcn_conv_forward.1} parent=65 // pred_region
              %s297 = ssub.s32 256, 1
              loop: start=0, step=1, limit=1
              $region75: #{gcn_conv_forward.1} parent=73 // loop_pre_header
                _
              $region76: #{gcn_conv_forward.1} parent=73 // loop_header
                %s299 = sphi 0, %s303
                %p300 = scmp.ge.s32.totalorder %s299, 1
                %s304 = sphi %s289, %s289
                %s305 = sphi %s284, %s284
              $region77: #{gcn_conv_forward.1} parent=73 // loop_header_branch
                %302 = sbr.rel (%p300) target = $region81
              $region78: #{gcn_conv_forward.1} parent=73 // loop_body
                %v306 = vld [vmem:[%s304] sm:%s297]
                %307 = vst [vmem:[%s305] sm:%s297] %v306
                %v308 = vld [vmem:[%s304 + $0x10] sm:%s297]
                %309 = vst [vmem:[%s305 + $0x8] sm:%s297] %v308
                %v310 = vld [vmem:[%s304 + $0x20] sm:%s297]
                %311 = vst [vmem:[%s305 + $0x10] sm:%s297] %v310
                %v312 = vld [vmem:[%s304 + $0x30] sm:%s297]
                %313 = vst [vmem:[%s305 + $0x18] sm:%s297] %v312
                %v314 = vld [vmem:[%s304 + $0x40] sm:%s297]
                %315 = vst [vmem:[%s305 + $0x20] sm:%s297] %v314
                %v316 = vld [vmem:[%s304 + $0x50] sm:%s297]
                %317 = vst [vmem:[%s305 + $0x28] sm:%s297] %v316
                %v318 = vld [vmem:[%s304 + $0x60] sm:%s297]
                %319 = vst [vmem:[%s305 + $0x30] sm:%s297] %v318
                %v320 = vld [vmem:[%s304 + $0x70] sm:%s297]
                %321 = vst [vmem:[%s305 + $0x38] sm:%s297] %v320
                %v322 = vld [vmem:[%s304 + $0x80] sm:%s297]
                %323 = vst [vmem:[%s305 + $0x40] sm:%s297] %v322
                %v324 = vld [vmem:[%s304 + $0x90] sm:%s297]
                %325 = vst [vmem:[%s305 + $0x48] sm:%s297] %v324
                %v326 = vld [vmem:[%s304 + $0xa0] sm:%s297]
                %327 = vst [vmem:[%s305 + $0x50] sm:%s297] %v326
                %v328 = vld [vmem:[%s304 + $0xb0] sm:%s297]
                %329 = vst [vmem:[%s305 + $0x58] sm:%s297] %v328
                %v330 = vld [vmem:[%s304 + $0xc0] sm:%s297]
                %331 = vst [vmem:[%s305 + $0x60] sm:%s297] %v330
                %v332 = vld [vmem:[%s304 + $0xd0] sm:%s297]
                %333 = vst [vmem:[%s305 + $0x68] sm:%s297] %v332
                %v334 = vld [vmem:[%s304 + $0xe0] sm:%s297]
                %335 = vst [vmem:[%s305 + $0x70] sm:%s297] %v334
                %v336 = vld [vmem:[%s304 + $0xf0] sm:%s297]
                %337 = vst [vmem:[%s305 + $0x78] sm:%s297] %v336
              $region79: #{gcn_conv_forward.1} parent=73 // loop_footer
                %s303 = sadd.s32 1, %s299
              $region80: #{gcn_conv_forward.1} parent=73 // loop_footer_branch
                %298 = sbr.rel target = $region76
              $region81: #{gcn_conv_forward.1} parent=73 // loop_exit
                _
            $region74: #{gcn_conv_forward.1} parent=65 // pred_fallthru
              _
          $region66: #{gcn_conv_forward.1} parent=61 // pred_fallthru
            _
          %382 = vnop
        $region62: #{gcn_conv_forward.1} parent=19 // pred_fallthru
          _
        // Predicated region
        $region97: #{gcn_conv_forward.1} parent=19 // pred_check
          %p383 = pneg %p98
        $region98: #{gcn_conv_forward.1} parent=19 // pred_check_branch
          %385 = sbr.rel (%p383) target = $region100
        $region99: #{gcn_conv_forward.1} parent=19 // pred_region
          %s386 = smul.u32 16, %s18
          %p387 = scmp.lt.s32.totalorder %s386, 31
          %s388 = scalar_select %p387, %s386, 31
          %s389 = smul.addr %s388, 8
          %s390 = scalar_lea.vmem %s2, %s389
          %s391 = smul.u32 16, %s18
        $region100: #{gcn_conv_forward.1} parent=19 // pred_fallthru
          _
      $region20: #{gcn_conv_forward.1} parent=5 // pred_fallthru
        _
      %p392 = scmp.le.s32.totalorder 1, %s10
      %p393 = scmp.lt.s32.totalorder %s10, 5
      %p394 = pnand %p392, %p393
      %p395 = pneg %p394
      // Predicated region
      $region101: #{gcn_conv_forward.1} parent=5 // pred_check
        _
      $region102: #{gcn_conv_forward.1} parent=5 // pred_check_branch
        %397 = sbr.rel (%p394) target = $region104
      $region103: #{gcn_conv_forward.1} parent=5 // pred_region
        %s398 = ssub.s32 %s10, 1
        %s399 = sand.u32 %s37, 1
        %s400 = sand.u32 %s37, 1
        %s401 = smul.addr %s400, 128
        %s402 = scalar_lea.vmem [#allocation4], %s401
        // Predicated region
        $region105: #{gcn_conv_forward.1} parent=103 // pred_check
          %p403 = pneg %p50
        $region106: #{gcn_conv_forward.1} parent=103 // pred_check_branch
          %405 = sbr.rel (%p403) target = $region108
        $region107: #{gcn_conv_forward.1} parent=103 // pred_region
          _
        $region108: #{gcn_conv_forward.1} parent=103 // pred_fallthru
          _
        %s406 = sand.u32 %s65, 1
        %s407 = sand.u32 %s65, 1
        %s408 = smul.addr %s407, 128
        %s409 = scalar_lea.vmem [#allocation5], %s408
        // Predicated region
        $region109: #{gcn_conv_forward.1} parent=103 // pred_check
          %p410 = pneg %p78
        $region110: #{gcn_conv_forward.1} parent=103 // pred_check_branch
          %412 = sbr.rel (%p410) target = $region112
        $region111: #{gcn_conv_forward.1} parent=103 // pred_region
          _
        $region112: #{gcn_conv_forward.1} parent=103 // pred_fallthru
          _
        %s413 = sand.u32 %s37, 1
        %s414 = sand.u32 %s37, 1
        %s415 = smul.addr %s414, 128
        %s416 = scalar_lea.vmem [#allocation4], %s415
        %p417 = pneg %p50
        %p418 = pneg %p47
        %s419 = sand.u32 %s65, 1
        %s420 = sand.u32 %s65, 1
        %s421 = smul.addr %s420, 128
        %s422 = scalar_lea.vmem [#allocation5], %s421
        %p423 = pneg %p78
        %p424 = pneg %p75
        %s425 = smul.u32 16, %s20
        %p426 = scmp.lt.s32.totalorder %s425, 31
        %s427 = scalar_select %p426, %s425, 31
        %s428 = smul.addr %s427, 8
        %s429 = scalar_lea.vmem %s2, %s428
        %p430 = pneg %p104
        %p431 = pneg %p101
        %p432 = pneg %p125
        %p433 = pneg %p122
        %p434 = pneg %p151
        %p435 = pneg %p148
        %s436 = smul.u32 16, %s19
        %p437 = scmp.lt.s32.totalorder %s436, 31
        %s438 = scalar_select %p437, %s436, 31
        %s439 = smul.addr %s438, 8
        %s440 = scalar_lea.vmem %s4, %s439
        %s441 = smul.u32 16, %s19
        %s442 = smul.u32 16, %s19
        %s443 = smul.u32 16, %s20
        %p444 = scmp.lt.s32.totalorder %s443, 31
        %s445 = scalar_select %p444, %s443, 31
        %s446 = smul.addr %s445, 8
        %s447 = scalar_lea.vmem %s2, %s446
        %s448 = smul.u32 16, %s20
        %s449 = smul.u32 16, %s19
        %p450 = scmp.lt.s32.totalorder %s449, 31
        %s451 = scalar_select %p450, %s449, 31
        %s452 = smul.addr %s451, 8
        %s453 = scalar_lea.vmem %s4, %s452
        %s454 = smul.u32 16, %s19
        %p455 = scmp.eq.s32.totalorder %s20, 0
        // Predicated region
        $region113: #{gcn_conv_forward.1} parent=103 // pred_check
          %p456 = pneg %p455
        $region114: #{gcn_conv_forward.1} parent=103 // pred_check_branch
          %458 = sbr.rel (%p456) target = $region116
        $region115: #{gcn_conv_forward.1} parent=103 // pred_region
          %459 = vst [vmem:[#allocation2] sm:$0xff] 0.0
          %460 = vst [vmem:[#allocation2 + $0x8] sm:$0xff] 0.0
          %461 = vst [vmem:[#allocation2 + $0x10] sm:$0xff] 0.0
          %462 = vst [vmem:[#allocation2 + $0x18] sm:$0xff] 0.0
          %463 = vst [vmem:[#allocation2 + $0x20] sm:$0xff] 0.0
          %464 = vst [vmem:[#allocation2 + $0x28] sm:$0xff] 0.0
          %465 = vst [vmem:[#allocation2 + $0x30] sm:$0xff] 0.0
          %466 = vst [vmem:[#allocation2 + $0x38] sm:$0xff] 0.0
          %467 = vst [vmem:[#allocation2 + $0x40] sm:$0xff] 0.0
          %468 = vst [vmem:[#allocation2 + $0x48] sm:$0xff] 0.0
          %469 = vst [vmem:[#allocation2 + $0x50] sm:$0xff] 0.0
          %470 = vst [vmem:[#allocation2 + $0x58] sm:$0xff] 0.0
          %471 = vst [vmem:[#allocation2 + $0x60] sm:$0xff] 0.0
          %472 = vst [vmem:[#allocation2 + $0x68] sm:$0xff] 0.0
          %473 = vst [vmem:[#allocation2 + $0x70] sm:$0xff] 0.0
          %474 = vst [vmem:[#allocation2 + $0x78] sm:$0xff] 0.0
          %vm475 = vcmask 7168
          %476 = vst.msk [vmem:[#allocation3] sm:$0xff] %vm475, 0.0
          %477 = vst.msk [vmem:[#allocation3 + $0x8] sm:$0xff] %vm475, 0.0
          %478 = vst.msk [vmem:[#allocation3 + $0x10] sm:$0xff] %vm475, 0.0
          %479 = vst.msk [vmem:[#allocation3 + $0x18] sm:$0xff] %vm475, 0.0
          %480 = vst.msk [vmem:[#allocation3 + $0x20] sm:$0xff] %vm475, 0.0
          %481 = vst.msk [vmem:[#allocation3 + $0x28] sm:$0xff] %vm475, 0.0
          %482 = vst.msk [vmem:[#allocation3 + $0x30] sm:$0xff] %vm475, 0.0
          %483 = vst.msk [vmem:[#allocation3 + $0x38] sm:$0xff] %vm475, 0.0
          %484 = vst.msk [vmem:[#allocation3 + $0x40] sm:$0xff] %vm475, 0.0
          %485 = vst.msk [vmem:[#allocation3 + $0x48] sm:$0xff] %vm475, 0.0
          %486 = vst.msk [vmem:[#allocation3 + $0x50] sm:$0xff] %vm475, 0.0
          %487 = vst.msk [vmem:[#allocation3 + $0x58] sm:$0xff] %vm475, 0.0
          %488 = vst.msk [vmem:[#allocation3 + $0x60] sm:$0xff] %vm475, 0.0
          %489 = vst.msk [vmem:[#allocation3 + $0x68] sm:$0xff] %vm475, 0.0
          %490 = vst.msk [vmem:[#allocation3 + $0x70] sm:$0xff] %vm475, 0.0
          %491 = vst.msk [vmem:[#allocation3 + $0x78] sm:$0xff] %vm475, 0.0
        $region116: #{gcn_conv_forward.1} parent=103 // pred_fallthru
          _
        %v492 = vld [vmem:[%s402] sm:$0xff]
        %v493 = vld [vmem:[%s402 + $0x8] sm:$0xff]
        %v494 = vld [vmem:[%s402 + $0x10] sm:$0xff]
        %v495 = vld [vmem:[%s402 + $0x18] sm:$0xff]
        %v496 = vld [vmem:[%s402 + $0x20] sm:$0xff]
        %v497 = vld [vmem:[%s402 + $0x28] sm:$0xff]
        %v498 = vld [vmem:[%s402 + $0x30] sm:$0xff]
        %v499 = vld [vmem:[%s402 + $0x38] sm:$0xff]
        %v500 = vld [vmem:[%s402 + $0x40] sm:$0xff]
        %v501 = vld [vmem:[%s402 + $0x48] sm:$0xff]
        %v502 = vld [vmem:[%s402 + $0x50] sm:$0xff]
        %v503 = vld [vmem:[%s402 + $0x58] sm:$0xff]
        %v504 = vld [vmem:[%s402 + $0x60] sm:$0xff]
        %v505 = vld [vmem:[%s402 + $0x68] sm:$0xff]
        %v506 = vld [vmem:[%s402 + $0x70] sm:$0xff]
        %v507 = vld [vmem:[%s402 + $0x78] sm:$0xff]
        %v508 = vld [vmem:[%s409] sm:$0xff]
        %v509 = vld [vmem:[%s409 + $0x8] sm:$0xff]
        %v510 = vld [vmem:[%s409 + $0x10] sm:$0xff]
        %v511 = vld [vmem:[%s409 + $0x18] sm:$0xff]
        %v512 = vld [vmem:[%s409 + $0x20] sm:$0xff]
        %v513 = vld [vmem:[%s409 + $0x28] sm:$0xff]
        %v514 = vld [vmem:[%s409 + $0x30] sm:$0xff]
        %v515 = vld [vmem:[%s409 + $0x38] sm:$0xff]
        %v516 = vld [vmem:[%s409 + $0x40] sm:$0xff]
        %v517 = vld [vmem:[%s409 + $0x48] sm:$0xff]
        %v518 = vld [vmem:[%s409 + $0x50] sm:$0xff]
        %v519 = vld [vmem:[%s409 + $0x58] sm:$0xff]
        %v520 = vld [vmem:[%s409 + $0x60] sm:$0xff]
        %v521 = vld [vmem:[%s409 + $0x68] sm:$0xff]
        %v522 = vld [vmem:[%s409 + $0x70] sm:$0xff]
        %v523 = vld [vmem:[%s409 + $0x78] sm:$0xff]
        %v524 = vmul.f32 %v492, %v508
        %v525 = vmul.f32 %v493, %v509
        %v526 = vmul.f32 %v494, %v510
        %v527 = vmul.f32 %v495, %v511
        %v528 = vmul.f32 %v496, %v512
        %v529 = vmul.f32 %v497, %v513
        %v530 = vmul.f32 %v498, %v514
        %v531 = vmul.f32 %v499, %v515
        %v532 = vmul.f32 %v500, %v516
        %v533 = vmul.f32 %v501, %v517
        %v534 = vmul.f32 %v502, %v518
        %v535 = vmul.f32 %v503, %v519
        %v536 = vmul.f32 %v504, %v520
        %v537 = vmul.f32 %v505, %v521
        %v538 = vmul.f32 %v506, %v522
        %v539 = vmul.f32 %v507, %v523
        %v540 = vld [vmem:[#allocation3] sm:$0xff]
        %v541 = vld [vmem:[#allocation3 + $0x8] sm:$0xff]
        %v542 = vld [vmem:[#allocation3 + $0x10] sm:$0xff]
        %v543 = vld [vmem:[#allocation3 + $0x18] sm:$0xff]
        %v544 = vld [vmem:[#allocation3 + $0x20] sm:$0xff]
        %v545 = vld [vmem:[#allocation3 + $0x28] sm:$0xff]
        %v546 = vld [vmem:[#allocation3 + $0x30] sm:$0xff]
        %v547 = vld [vmem:[#allocation3 + $0x38] sm:$0xff]
        %v548 = vld [vmem:[#allocation3 + $0x40] sm:$0xff]
        %v549 = vld [vmem:[#allocation3 + $0x48] sm:$0xff]
        %v550 = vld [vmem:[#allocation3 + $0x50] sm:$0xff]
        %v551 = vld [vmem:[#allocation3 + $0x58] sm:$0xff]
        %v552 = vld [vmem:[#allocation3 + $0x60] sm:$0xff]
        %v553 = vld [vmem:[#allocation3 + $0x68] sm:$0xff]
        %v554 = vld [vmem:[#allocation3 + $0x70] sm:$0xff]
        %v555 = vld [vmem:[#allocation3 + $0x78] sm:$0xff]
        %v556 = vand.u32 2147483647, %v524
        %v557 = vand.u32 2147483647, %v525
        %v558 = vand.u32 2147483647, %v526
        %v559 = vand.u32 2147483647, %v527
        %v560 = vand.u32 2147483647, %v528
        %v561 = vand.u32 2147483647, %v529
        %v562 = vand.u32 2147483647, %v530
        %v563 = vand.u32 2147483647, %v531
        %v564 = vand.u32 2147483647, %v532
        %v565 = vand.u32 2147483647, %v533
        %v566 = vand.u32 2147483647, %v534
        %v567 = vand.u32 2147483647, %v535
        %v568 = vand.u32 2147483647, %v536
        %v569 = vand.u32 2147483647, %v537
        %v570 = vand.u32 2147483647, %v538
        %v571 = vand.u32 2147483647, %v539
        %572 = vadd.xlane.f32.xlu0 %v556
        %v573 = vpop.xlane.xlu0 %572
        %574 = vadd.xlane.f32.xlu0 %v557
        %v575 = vpop.xlane.xlu0 %574
        %576 = vadd.xlane.f32.xlu0 %v558
        %v577 = vpop.xlane.xlu0 %576
        %578 = vadd.xlane.f32.xlu0 %v559
        %v579 = vpop.xlane.xlu0 %578
        %580 = vadd.xlane.f32.xlu0 %v560
        %v581 = vpop.xlane.xlu0 %580
        %582 = vadd.xlane.f32.xlu0 %v561
        %v583 = vpop.xlane.xlu0 %582
        %584 = vadd.xlane.f32.xlu0 %v562
        %v585 = vpop.xlane.xlu0 %584
        %586 = vadd.xlane.f32.xlu0 %v563
        %v587 = vpop.xlane.xlu0 %586
        %588 = vadd.xlane.f32.xlu0 %v564
        %v589 = vpop.xlane.xlu0 %588
        %590 = vadd.xlane.f32.xlu0 %v565
        %v591 = vpop.xlane.xlu0 %590
        %592 = vadd.xlane.f32.xlu0 %v566
        %v593 = vpop.xlane.xlu0 %592
        %594 = vadd.xlane.f32.xlu0 %v567
        %v595 = vpop.xlane.xlu0 %594
        %596 = vadd.xlane.f32.xlu0 %v568
        %v597 = vpop.xlane.xlu0 %596
        %598 = vadd.xlane.f32.xlu0 %v569
        %v599 = vpop.xlane.xlu0 %598
        %600 = vadd.xlane.f32.xlu0 %v570
        %v601 = vpop.xlane.xlu0 %600
        %602 = vadd.xlane.f32.xlu0 %v571
        %v603 = vpop.xlane.xlu0 %602
        %v604 = vadd.f32 %v540, %v573
        %v605 = vadd.f32 %v541, %v575
        %v606 = vadd.f32 %v542, %v577
        %v607 = vadd.f32 %v543, %v579
        %v608 = vadd.f32 %v544, %v581
        %v609 = vadd.f32 %v545, %v583
        %v610 = vadd.f32 %v546, %v585
        %v611 = vadd.f32 %v547, %v587
        %v612 = vadd.f32 %v548, %v589
        %v613 = vadd.f32 %v549, %v591
        %v614 = vadd.f32 %v550, %v593
        %v615 = vadd.f32 %v551, %v595
        %v616 = vadd.f32 %v552, %v597
        %v617 = vadd.f32 %v553, %v599
        %v618 = vadd.f32 %v554, %v601
        %v619 = vadd.f32 %v555, %v603
        %vm620 = vcmask 7168
        %621 = vst.msk [vmem:[#allocation3] sm:$0xff] %vm620, %v604
        %622 = vst.msk [vmem:[#allocation3 + $0x8] sm:$0xff] %vm620, %v605
        %623 = vst.msk [vmem:[#allocation3 + $0x10] sm:$0xff] %vm620, %v606
        %624 = vst.msk [vmem:[#allocation3 + $0x18] sm:$0xff] %vm620, %v607
        %625 = vst.msk [vmem:[#allocation3 + $0x20] sm:$0xff] %vm620, %v608
        %626 = vst.msk [vmem:[#allocation3 + $0x28] sm:$0xff] %vm620, %v609
        %627 = vst.msk [vmem:[#allocation3 + $0x30] sm:$0xff] %vm620, %v610
        %628 = vst.msk [vmem:[#allocation3 + $0x38] sm:$0xff] %vm620, %v611
        %629 = vst.msk [vmem:[#allocation3 + $0x40] sm:$0xff] %vm620, %v612
        %630 = vst.msk [vmem:[#allocation3 + $0x48] sm:$0xff] %vm620, %v613
        %631 = vst.msk [vmem:[#allocation3 + $0x50] sm:$0xff] %vm620, %v614
        %632 = vst.msk [vmem:[#allocation3 + $0x58] sm:$0xff] %vm620, %v615
        %633 = vst.msk [vmem:[#allocation3 + $0x60] sm:$0xff] %vm620, %v616
        %634 = vst.msk [vmem:[#allocation3 + $0x68] sm:$0xff] %vm620, %v617
        %635 = vst.msk [vmem:[#allocation3 + $0x70] sm:$0xff] %vm620, %v618
        %636 = vst.msk [vmem:[#allocation3 + $0x78] sm:$0xff] %vm620, %v619
        %v637 = vld [vmem:[#allocation2] sm:$0xff]
        %v638 = vld [vmem:[#allocation2 + $0x8] sm:$0xff]
        %v639 = vld [vmem:[#allocation2 + $0x10] sm:$0xff]
        %v640 = vld [vmem:[#allocation2 + $0x18] sm:$0xff]
        %v641 = vld [vmem:[#allocation2 + $0x20] sm:$0xff]
        %v642 = vld [vmem:[#allocation2 + $0x28] sm:$0xff]
        %v643 = vld [vmem:[#allocation2 + $0x30] sm:$0xff]
        %v644 = vld [vmem:[#allocation2 + $0x38] sm:$0xff]
        %v645 = vld [vmem:[#allocation2 + $0x40] sm:$0xff]
        %v646 = vld [vmem:[#allocation2 + $0x48] sm:$0xff]
        %v647 = vld [vmem:[#allocation2 + $0x50] sm:$0xff]
        %v648 = vld [vmem:[#allocation2 + $0x58] sm:$0xff]
        %v649 = vld [vmem:[#allocation2 + $0x60] sm:$0xff]
        %v650 = vld [vmem:[#allocation2 + $0x68] sm:$0xff]
        %v651 = vld [vmem:[#allocation2 + $0x70] sm:$0xff]
        %v652 = vld [vmem:[#allocation2 + $0x78] sm:$0xff]
        %v653 = vld [vmem:[%s447] sm:$0xff]
        %v654 = vld [vmem:[%s447 + $0x8] sm:$0xff]
        %v655 = vld [vmem:[%s447 + $0x10] sm:$0xff]
        %v656 = vld [vmem:[%s447 + $0x18] sm:$0xff]
        %v657 = vld [vmem:[%s447 + $0x20] sm:$0xff]
        %v658 = vld [vmem:[%s447 + $0x28] sm:$0xff]
        %v659 = vld [vmem:[%s447 + $0x30] sm:$0xff]
        %v660 = vld [vmem:[%s447 + $0x38] sm:$0xff]
        %v661 = vld [vmem:[%s447 + $0x40] sm:$0xff]
        %v662 = vld [vmem:[%s447 + $0x48] sm:$0xff]
        %v663 = vld [vmem:[%s447 + $0x50] sm:$0xff]
        %v664 = vld [vmem:[%s447 + $0x58] sm:$0xff]
        %v665 = vld [vmem:[%s447 + $0x60] sm:$0xff]
        %v666 = vld [vmem:[%s447 + $0x68] sm:$0xff]
        %v667 = vld [vmem:[%s447 + $0x70] sm:$0xff]
        %v668 = vld [vmem:[%s447 + $0x78] sm:$0xff]
        %669 = vmatpush.msra.mxu0 %v668
        %670 = vmatpush.msra.mxu0 %v667
        %671 = vmatpush.msra.mxu0 %v666
        %672 = vmatpush.msra.mxu0 %v665
        %673 = vmatpush.msra.mxu0 %v664
        %674 = vmatpush.msra.mxu0 %v663
        %675 = vmatpush.msra.mxu0 %v662
        %676 = vmatpush.msra.mxu0 %v661
        %677 = vmatpush.msra.mxu0 %v660
        %678 = vmatpush.msra.mxu0 %v659
        %679 = vmatpush.msra.mxu0 %v658
        %680 = vmatpush.msra.mxu0 %v657
        %681 = vmatpush.msra.mxu0 %v656
        %682 = vmatpush.msra.mxu0 %v655
        %683 = vmatpush.msra.mxu0 %v654
        %684 = vmatpush.msra.mxu0 %v653
        %685 = vmatmul.f32.gmra.mxu0 %v524
        %v686 = vpop.f32.mrf.mxu0
        %v687 = vadd.f32 0.0, %v686
        %688 = vmatmul.f32.gmra.mxu0 %v525
        %v689 = vpop.f32.mrf.mxu0
        %v690 = vadd.f32 0.0, %v689
        %691 = vmatmul.f32.gmra.mxu0 %v526
        %v692 = vpop.f32.mrf.mxu0
        %v693 = vadd.f32 0.0, %v692
        %694 = vmatmul.f32.gmra.mxu0 %v527
        %v695 = vpop.f32.mrf.mxu0
        %v696 = vadd.f32 0.0, %v695
        %697 = vmatmul.f32.gmra.mxu0 %v528
        %v698 = vpop.f32.mrf.mxu0
        %v699 = vadd.f32 0.0, %v698
        %700 = vmatmul.f32.gmra.mxu0 %v529
        %v701 = vpop.f32.mrf.mxu0
        %v702 = vadd.f32 0.0, %v701
        %703 = vmatmul.f32.gmra.mxu0 %v530
        %v704 = vpop.f32.mrf.mxu0
        %v705 = vadd.f32 0.0, %v704
        %706 = vmatmul.f32.gmra.mxu0 %v531
        %v707 = vpop.f32.mrf.mxu0
        %v708 = vadd.f32 0.0, %v707
        %709 = vmatmul.f32.gmra.mxu0 %v532
        %v710 = vpop.f32.mrf.mxu0
        %v711 = vadd.f32 0.0, %v710
        %712 = vmatmul.f32.gmra.mxu0 %v533
        %v713 = vpop.f32.mrf.mxu0
        %v714 = vadd.f32 0.0, %v713
        %715 = vmatmul.f32.gmra.mxu0 %v534
        %v716 = vpop.f32.mrf.mxu0
        %v717 = vadd.f32 0.0, %v716
        %718 = vmatmul.f32.gmra.mxu0 %v535
        %v719 = vpop.f32.mrf.mxu0
        %v720 = vadd.f32 0.0, %v719
        %721 = vmatmul.f32.gmra.mxu0 %v536
        %v722 = vpop.f32.mrf.mxu0
        %v723 = vadd.f32 0.0, %v722
        %724 = vmatmul.f32.gmra.mxu0 %v537
        %v725 = vpop.f32.mrf.mxu0
        %v726 = vadd.f32 0.0, %v725
        %727 = vmatmul.f32.gmra.mxu0 %v538
        %v728 = vpop.f32.mrf.mxu0
        %v729 = vadd.f32 0.0, %v728
        %730 = vmatmul.f32.gmra.mxu0 %v539
        %v731 = vpop.f32.mrf.mxu0
        %v732 = vadd.f32 0.0, %v731
        %733 = vdwg.mxu0
        %v734 = vadd.f32 %v637, %v687
        %v735 = vadd.f32 %v638, %v690
        %v736 = vadd.f32 %v639, %v693
        %v737 = vadd.f32 %v640, %v696
        %v738 = vadd.f32 %v641, %v699
        %v739 = vadd.f32 %v642, %v702
        %v740 = vadd.f32 %v643, %v705
        %v741 = vadd.f32 %v644, %v708
        %v742 = vadd.f32 %v645, %v711
        %v743 = vadd.f32 %v646, %v714
        %v744 = vadd.f32 %v647, %v717
        %v745 = vadd.f32 %v648, %v720
        %v746 = vadd.f32 %v649, %v723
        %v747 = vadd.f32 %v650, %v726
        %v748 = vadd.f32 %v651, %v729
        %v749 = vadd.f32 %v652, %v732
        %750 = vst [vmem:[#allocation2] sm:$0xff] %v734
        %751 = vst [vmem:[#allocation2 + $0x8] sm:$0xff] %v735
        %752 = vst [vmem:[#allocation2 + $0x10] sm:$0xff] %v736
        %753 = vst [vmem:[#allocation2 + $0x18] sm:$0xff] %v737
        %754 = vst [vmem:[#allocation2 + $0x20] sm:$0xff] %v738
        %755 = vst [vmem:[#allocation2 + $0x28] sm:$0xff] %v739
        %756 = vst [vmem:[#allocation2 + $0x30] sm:$0xff] %v740
        %757 = vst [vmem:[#allocation2 + $0x38] sm:$0xff] %v741
        %758 = vst [vmem:[#allocation2 + $0x40] sm:$0xff] %v742
        %759 = vst [vmem:[#allocation2 + $0x48] sm:$0xff] %v743
        %760 = vst [vmem:[#allocation2 + $0x50] sm:$0xff] %v744
        %761 = vst [vmem:[#allocation2 + $0x58] sm:$0xff] %v745
        %762 = vst [vmem:[#allocation2 + $0x60] sm:$0xff] %v746
        %763 = vst [vmem:[#allocation2 + $0x68] sm:$0xff] %v747
        %764 = vst [vmem:[#allocation2 + $0x70] sm:$0xff] %v748
        %765 = vst [vmem:[#allocation2 + $0x78] sm:$0xff] %v749
        %p766 = scmp.eq.s32.totalorder %s20, 1
        // Predicated region
        $region117: #{gcn_conv_forward.1} parent=103 // pred_check
          %p767 = pneg %p766
        $region118: #{gcn_conv_forward.1} parent=103 // pred_check_branch
          %769 = sbr.rel (%p767) target = $region120
        $region119: #{gcn_conv_forward.1} parent=103 // pred_region
          %v770 = vld [vmem:[#allocation3] sm:$0xff]
          %v771 = vld [vmem:[#allocation3 + $0x8] sm:$0xff]
          %v772 = vld [vmem:[#allocation3 + $0x10] sm:$0xff]
          %v773 = vld [vmem:[#allocation3 + $0x18] sm:$0xff]
          %v774 = vld [vmem:[#allocation3 + $0x20] sm:$0xff]
          %v775 = vld [vmem:[#allocation3 + $0x28] sm:$0xff]
          %v776 = vld [vmem:[#allocation3 + $0x30] sm:$0xff]
          %v777 = vld [vmem:[#allocation3 + $0x38] sm:$0xff]
          %v778 = vld [vmem:[#allocation3 + $0x40] sm:$0xff]
          %v779 = vld [vmem:[#allocation3 + $0x48] sm:$0xff]
          %v780 = vld [vmem:[#allocation3 + $0x50] sm:$0xff]
          %v781 = vld [vmem:[#allocation3 + $0x58] sm:$0xff]
          %v782 = vld [vmem:[#allocation3 + $0x60] sm:$0xff]
          %v783 = vld [vmem:[#allocation3 + $0x68] sm:$0xff]
          %v784 = vld [vmem:[#allocation3 + $0x70] sm:$0xff]
          %v785 = vld [vmem:[#allocation3 + $0x78] sm:$0xff]
          %v786 = vmax.f32 %v770, 1e-12
          %v787 = vmax.f32 %v771, 1e-12
          %v788 = vmax.f32 %v772, 1e-12
          %v789 = vmax.f32 %v773, 1e-12
          %v790 = vmax.f32 %v774, 1e-12
          %v791 = vmax.f32 %v775, 1e-12
          %v792 = vmax.f32 %v776, 1e-12
          %v793 = vmax.f32 %v777, 1e-12
          %v794 = vmax.f32 %v778, 1e-12
          %v795 = vmax.f32 %v779, 1e-12
          %v796 = vmax.f32 %v780, 1e-12
          %v797 = vmax.f32 %v781, 1e-12
          %v798 = vmax.f32 %v782, 1e-12
          %v799 = vmax.f32 %v783, 1e-12
          %v800 = vmax.f32 %v784, 1e-12
          %v801 = vmax.f32 %v785, 1e-12
          %v802 = vrcp.pop %v786
          %v803 = vrcp.pop %v787
          %v804 = vrcp.pop %v788
          %v805 = vrcp.pop %v789
          %v806 = vrcp.pop %v790
          %v807 = vrcp.pop %v791
          %v808 = vrcp.pop %v792
          %v809 = vrcp.pop %v793
          %v810 = vrcp.pop %v794
          %v811 = vrcp.pop %v795
          %v812 = vrcp.pop %v796
          %v813 = vrcp.pop %v797
          %v814 = vrcp.pop %v798
          %v815 = vrcp.pop %v799
          %v816 = vrcp.pop %v800
          %v817 = vrcp.pop %v801
          %v818 = vld [vmem:[#allocation2] sm:$0xff]
          %v819 = vld [vmem:[#allocation2 + $0x8] sm:$0xff]
          %v820 = vld [vmem:[#allocation2 + $0x10] sm:$0xff]
          %v821 = vld [vmem:[#allocation2 + $0x18] sm:$0xff]
          %v822 = vld [vmem:[#allocation2 + $0x20] sm:$0xff]
          %v823 = vld [vmem:[#allocation2 + $0x28] sm:$0xff]
          %v824 = vld [vmem:[#allocation2 + $0x30] sm:$0xff]
          %v825 = vld [vmem:[#allocation2 + $0x38] sm:$0xff]
          %v826 = vld [vmem:[#allocation2 + $0x40] sm:$0xff]
          %v827 = vld [vmem:[#allocation2 + $0x48] sm:$0xff]
          %v828 = vld [vmem:[#allocation2 + $0x50] sm:$0xff]
          %v829 = vld [vmem:[#allocation2 + $0x58] sm:$0xff]
          %v830 = vld [vmem:[#allocation2 + $0x60] sm:$0xff]
          %v831 = vld [vmem:[#allocation2 + $0x68] sm:$0xff]
          %v832 = vld [vmem:[#allocation2 + $0x70] sm:$0xff]
          %v833 = vld [vmem:[#allocation2 + $0x78] sm:$0xff]
          %835 = vset.pattern.permute.xlu0 0
          %836 = vperm.xlu0 %835, %v802
          %v837 = vpop.permute.xlu0 %836
          %840 = vset.pattern.permute.xlu0 0
          %841 = vperm.xlu0 %840, %v803
          %v842 = vpop.permute.xlu0 %841
          %845 = vset.pattern.permute.xlu0 0
          %846 = vperm.xlu0 %845, %v804
          %v847 = vpop.permute.xlu0 %846
          %850 = vset.pattern.permute.xlu0 0
          %851 = vperm.xlu0 %850, %v805
          %v852 = vpop.permute.xlu0 %851
          %855 = vset.pattern.permute.xlu0 0
          %856 = vperm.xlu0 %855, %v806
          %v857 = vpop.permute.xlu0 %856
          %860 = vset.pattern.permute.xlu0 0
          %861 = vperm.xlu0 %860, %v807
          %v862 = vpop.permute.xlu0 %861
          %865 = vset.pattern.permute.xlu0 0
          %866 = vperm.xlu0 %865, %v808
          %v867 = vpop.permute.xlu0 %866
          %870 = vset.pattern.permute.xlu0 0
          %871 = vperm.xlu0 %870, %v809
          %v872 = vpop.permute.xlu0 %871
          %875 = vset.pattern.permute.xlu0 0
          %876 = vperm.xlu0 %875, %v810
          %v877 = vpop.permute.xlu0 %876
          %880 = vset.pattern.permute.xlu0 0
          %881 = vperm.xlu0 %880, %v811
          %v882 = vpop.permute.xlu0 %881
          %885 = vset.pattern.permute.xlu0 0
          %886 = vperm.xlu0 %885, %v812
          %v887 = vpop.permute.xlu0 %886
          %890 = vset.pattern.permute.xlu0 0
          %891 = vperm.xlu0 %890, %v813
          %v892 = vpop.permute.xlu0 %891
          %895 = vset.pattern.permute.xlu0 0
          %896 = vperm.xlu0 %895, %v814
          %v897 = vpop.permute.xlu0 %896
          %900 = vset.pattern.permute.xlu0 0
          %901 = vperm.xlu0 %900, %v815
          %v902 = vpop.permute.xlu0 %901
          %905 = vset.pattern.permute.xlu0 0
          %906 = vperm.xlu0 %905, %v816
          %v907 = vpop.permute.xlu0 %906
          %910 = vset.pattern.permute.xlu0 0
          %911 = vperm.xlu0 %910, %v817
          %v912 = vpop.permute.xlu0 %911
          %v914 = vmul.f32 %v818, %v837
          %v915 = vmul.f32 %v819, %v842
          %v916 = vmul.f32 %v820, %v847
          %v917 = vmul.f32 %v821, %v852
          %v918 = vmul.f32 %v822, %v857
          %v919 = vmul.f32 %v823, %v862
          %v920 = vmul.f32 %v824, %v867
          %v921 = vmul.f32 %v825, %v872
          %v922 = vmul.f32 %v826, %v877
          %v923 = vmul.f32 %v827, %v882
          %v924 = vmul.f32 %v828, %v887
          %v925 = vmul.f32 %v829, %v892
          %v926 = vmul.f32 %v830, %v897
          %v927 = vmul.f32 %v831, %v902
          %v928 = vmul.f32 %v832, %v907
          %v929 = vmul.f32 %v833, %v912
          %v930 = vld [vmem:[%s3] sm:$0x1]
          %v932 = vperm.slane %v930, 0
          %v934 = vadd.f32 %v914, %v932
          %v935 = vadd.f32 %v915, %v932
          %v936 = vadd.f32 %v916, %v932
          %v937 = vadd.f32 %v917, %v932
          %v938 = vadd.f32 %v918, %v932
          %v939 = vadd.f32 %v919, %v932
          %v940 = vadd.f32 %v920, %v932
          %v941 = vadd.f32 %v921, %v932
          %v942 = vadd.f32 %v922, %v932
          %v943 = vadd.f32 %v923, %v932
          %v944 = vadd.f32 %v924, %v932
          %v945 = vadd.f32 %v925, %v932
          %v946 = vadd.f32 %v926, %v932
          %v947 = vadd.f32 %v927, %v932
          %v948 = vadd.f32 %v928, %v932
          %v949 = vadd.f32 %v929, %v932
          %950 = vst [vmem:[%s453] sm:$0xff] %v934
          %951 = vst [vmem:[%s453 + $0x8] sm:$0xff] %v935
          %952 = vst [vmem:[%s453 + $0x10] sm:$0xff] %v936
          %953 = vst [vmem:[%s453 + $0x18] sm:$0xff] %v937
          %954 = vst [vmem:[%s453 + $0x20] sm:$0xff] %v938
          %955 = vst [vmem:[%s453 + $0x28] sm:$0xff] %v939
          %956 = vst [vmem:[%s453 + $0x30] sm:$0xff] %v940
          %957 = vst [vmem:[%s453 + $0x38] sm:$0xff] %v941
          %958 = vst [vmem:[%s453 + $0x40] sm:$0xff] %v942
          %959 = vst [vmem:[%s453 + $0x48] sm:$0xff] %v943
          %960 = vst [vmem:[%s453 + $0x50] sm:$0xff] %v944
          %961 = vst [vmem:[%s453 + $0x58] sm:$0xff] %v945
          %962 = vst [vmem:[%s453 + $0x60] sm:$0xff] %v946
          %963 = vst [vmem:[%s453 + $0x68] sm:$0xff] %v947
          %964 = vst [vmem:[%s453 + $0x70] sm:$0xff] %v948
          %965 = vst [vmem:[%s453 + $0x78] sm:$0xff] %v949
        $region120: #{gcn_conv_forward.1} parent=103 // pred_fallthru
          _
        %s966 = smul.u32 16, %s19
        %p967 = scmp.lt.s32.totalorder %s966, 31
        %s968 = scalar_select %p967, %s966, 31
        %s969 = smul.addr %s968, 8
        %s970 = scalar_lea.vmem %s4, %s969
        // Predicated region
        $region121: #{gcn_conv_forward.1} parent=103 // pred_check
          %p971 = pneg %p148
        $region122: #{gcn_conv_forward.1} parent=103 // pred_check_branch
          %973 = sbr.rel (%p971) target = $region124
        $region123: #{gcn_conv_forward.1} parent=103 // pred_region
          %s974 = smul.u32 16, %s19
        $region124: #{gcn_conv_forward.1} parent=103 // pred_fallthru
          _
      $region104: #{gcn_conv_forward.1} parent=5 // pred_fallthru
        _
      %p975 = scmp.le.s32.totalorder 2, %s10
      // Predicated region
      $region125: #{gcn_conv_forward.1} parent=5 // pred_check
        %p976 = pneg %p975
      $region126: #{gcn_conv_forward.1} parent=5 // pred_check_branch
        %978 = sbr.rel (%p976) target = $region128
      $region127: #{gcn_conv_forward.1} parent=5 // pred_region
        %s979 = ssub.s32 %s10, 2
        // Predicated region
        $region129: #{gcn_conv_forward.1} parent=127 // pred_check
          %p980 = pneg %p154
        $region130: #{gcn_conv_forward.1} parent=127 // pred_check_branch
          %982 = sbr.rel (%p980) target = $region132
        $region131: #{gcn_conv_forward.1} parent=127 // pred_region
          %s983 = smul.u32 16, %s21
          %p984 = scmp.lt.s32.totalorder %s983, 31
          %s985 = scalar_select %p984, %s983, 31
          %s986 = smul.addr %s985, 8
          %s987 = scalar_lea.vmem %s4, %s986
        $region132: #{gcn_conv_forward.1} parent=127 // pred_fallthru
          _
      $region128: #{gcn_conv_forward.1} parent=5 // pred_fallthru
        _
    $region6: #{gcn_conv_forward.1} parent=1 // loop_footer
      %s14 = sadd.s32 1, %s10
    $region7: #{gcn_conv_forward.1} parent=1 // loop_footer_branch
      %9 = sbr.rel target = $region3
    $region8: #{gcn_conv_forward.1} parent=1 // loop_exit
      _

</llo_original>
